<compile_context>
chip_gen: v5e
topology: v5e:2x2
jax: 0.10.0
libtpu: 0.0.40
codegen_flags: <defaults>
</compile_context>

<pallas_src>
import jax
import jax.numpy as jnp
from jax import lax
from jax.experimental import pallas as pl
from jax.experimental.pallas import tpu as pltpu
import numpy as np


def _make_divide_proposals_kernel(bs, L, C, H, P):
    """Kernel closure over the static problem sizes."""
    f32 = jnp.float32
    eps = 1e-8

    def kernel(lhs_ref, rhs_ref, mask_ref, w_ref):
        # lhs_ref : (bs, 3L, C+H) bf16  rows [onehot|0], [lang_score|0], [0|lang_emb]
        # rhs_ref : (bs, C+H, P)  bf16  rows [sem_cls_scores^T ; bbox_feature^T]
        # mask_ref: (bs, 1, P)    f32   additive objectness mask (0 / -inf)
        # w_ref   : (bs, L, P)    f32   coarse weights
        for b in range(bs):           # bs is tiny and static -> unrolled
            lhs = lhs_ref[b]          # (3L, C+H)
            rhs = rhs_ref[b]          # (C+H, P), lane-dense over proposals

            # One fused MXU matmul replaces the three tiny ones.
            scores = jnp.dot(lhs, rhs, preferred_element_type=f32)   # (3L, P)
            sel = scores[:L]          # gathered target-class scores
            dots = scores[L:2 * L]    # lang_score . sem_cls_scores
            mil = scores[2 * L:]      # lang_emb  . bbox_feature

            def softmax_p(x):         # softmax over the proposal (lane) axis
                e = jnp.exp(x - jnp.max(x, axis=-1, keepdims=True))
                return e / jnp.sum(e, axis=-1, keepdims=True)        # exact div

            # cosine-similarity denominators:
            #   ||lang_score|| from the (zero-padded) ls rows of the LHS,
            #   ||sem||        from the (C, P) sem rows of the RHS (in-kernel,
            #                  no side-input DMA).
            ls_f32 = lhs[L:2 * L].astype(f32)                         # (L, C+H)
            inv_n_ls = 1.0 / jnp.maximum(
                jnp.sqrt(jnp.sum(ls_f32 * ls_f32, axis=-1, keepdims=True)), eps)
            sem_f32 = rhs[:C].astype(f32)                             # (C, P)
            inv_n_sem = 1.0 / jnp.maximum(
                jnp.sqrt(jnp.sum(sem_f32 * sem_f32, axis=0, keepdims=True)), eps)
            cls_sim = dots * inv_n_ls * inv_n_sem                     # (L, P)

            # weights = 0.5*mil + pred_by_target_cls + cls_sim (scannet,
            # mil+text on), then masked_fill_(non_objectness, -inf) via the
            # additive mask (unmasked terms are finite thanks to eps floors).
            w_ref[b] = (0.5 * softmax_p(mil) + softmax_p(sel) + cls_sim
                        + mask_ref[b])

    return kernel


def divide_proposals(bbox_feature, sem_cls_scores, lang_score, lang_emb,
                     objectness_pred, object_cat_list, num_target):
    bs, P, H = bbox_feature.shape
    C = sem_cls_scores.shape[-1]
    BL = lang_score.shape[0]
    L = BL // bs
    mxu_dtype = jnp.bfloat16

    # Single argmax over classes, reused for lang_acc AND the onehot LHS rows.
    pred_lang_cat = jnp.argmax(lang_score, axis=1)                    # (BL,)
    object_cat = object_cat_list.reshape(-1)
    lang_acc = jnp.mean((pred_lang_cat == object_cat).astype(jnp.float32))

    # Fused LHS: per batch a (3L, C+H) bf16 row-stack
    #   rows 0..L   : [onehot        | 0_H]
    #   rows L..2L  : [lang_score    | 0_H]
    #   rows 2L..3L : [0_C           | lang_emb]
    onehot = jax.nn.one_hot(pred_lang_cat, C, dtype=mxu_dtype).reshape(bs, L, C)
    ls3 = lang_score.reshape(bs, L, C).astype(mxu_dtype)
    lf3 = lang_emb.reshape(bs, L, H).astype(mxu_dtype)
    zH = jnp.zeros((bs, L, H), mxu_dtype)
    zC = jnp.zeros((bs, L, C), mxu_dtype)
    lhs = jnp.concatenate([
        jnp.concatenate([onehot, zH], axis=-1),
        jnp.concatenate([ls3, zH], axis=-1),
        jnp.concatenate([zC, lf3], axis=-1),
    ], axis=1)                                                        # (bs, 3L, C+H)

    # RHS pre-transposed to MXU-native (K, N), lane-dense over proposals.
    rhs = jnp.concatenate([
        jnp.swapaxes(sem_cls_scores.astype(mxu_dtype), 1, 2),         # (bs, C, P)
        jnp.swapaxes(bbox_feature.astype(mxu_dtype), 1, 2),           # (bs, H, P)
    ], axis=1)                                                        # (bs, C+H, P)

    # Additive objectness mask (0 / -inf), lane-dense over proposals.
    obj_mask = jnp.where(objectness_pred == 0, -jnp.inf, 0.0)
    obj_mask = obj_mask.astype(jnp.float32).reshape(bs, 1, P)

    kernel = _make_divide_proposals_kernel(bs, L, C, H, P)
    weights3 = pl.pallas_call(
        kernel,
        out_shape=jax.ShapeDtypeStruct((bs, L, P), jnp.float32),
        in_specs=[
            pl.BlockSpec(memory_space=pltpu.MemorySpace.VMEM),        # lhs
            pl.BlockSpec(memory_space=pltpu.MemorySpace.VMEM),        # rhs
            pl.BlockSpec(memory_space=pltpu.MemorySpace.VMEM),        # obj mask
        ],
        out_specs=pl.BlockSpec(memory_space=pltpu.MemorySpace.VMEM),
    )(lhs, rhs, obj_mask)

    weights = weights3.reshape(BL, P)        # == data_dict['coarse_weights']

    # ---- glue (plain JAX, not hot path) ------------------------------------
    # descending sort over proposals, keep first num_target; gather features
    # with a one-hot MXU matmul instead of an XLA gather.
    target_ids = lax.top_k(weights, num_target)[1]                    # (BL, T)
    tid = target_ids.reshape(bs, L, num_target)
    sel_onehot = (tid[..., None] ==
                  jnp.arange(P, dtype=tid.dtype)[None, None, None, :]
                  ).astype(bbox_feature.dtype)                        # (bs,L,T,P)
    target_feat = jnp.einsum("bltp,bph->blth", sel_onehot, bbox_feature)

    return {
        "lang_acc": lang_acc,
        "coarse_weights": weights,
        "target_ids": tid,
        "target_feat": target_feat,
    }


def _reference_weights(bbox_feature, sem_cls_scores, lang_score, lang_emb,
                       objectness_pred):
    """Pure-JAX mirror of torch divide_proposals weight computation."""
    bs, P, H = bbox_feature.shape
    C = sem_cls_scores.shape[-1]
    BL = lang_score.shape[0]
    L = BL // bs

    pred_lang_cat = jnp.argmax(lang_score, axis=1)                    # (BL,)
    sem = jnp.broadcast_to(sem_cls_scores[:, None], (bs, L, P, C)).reshape(BL, P, C)
    pred_by_target = jnp.take_along_axis(
        sem, pred_lang_cat[:, None, None], axis=2)[..., 0]            # (BL, P)
    pred_by_target = jax.nn.softmax(pred_by_target, axis=-1)

    ls = lang_score[:, None, :]                                       # (BL, 1, C)
    eps = 1e-8
    cls_sim = jnp.sum(sem * ls, -1) / (
        jnp.maximum(jnp.linalg.norm(sem, axis=-1), eps)
        * jnp.maximum(jnp.linalg.norm(ls, axis=-1), eps))

    lang_feat = lang_emb.reshape(bs, L, H)
    mil = jnp.einsum("blh,bph->blp", lang_feat, bbox_feature).reshape(BL, P)
    mil = jax.nn.softmax(mil, axis=-1)

    w = 0.5 * mil + pred_by_target + cls_sim
    non_obj = jnp.broadcast_to((objectness_pred == 0)[:, None], (bs, L, P)).reshape(BL, P)
    return jnp.where(non_obj, -jnp.inf, w)


if __name__ == "__main__":
    # batch, phrases, proposals, hidden, classes, num_target
    bs, L, P, H, C, T = 2, 8, 128, 32, 32, 32

    key = jax.random.PRNGKey(0)
    k = jax.random.split(key, 6)

    # Synthetic stand-ins for the outputs of the (external) lang / relation /
    # match / detection submodules.  Values are rounded to be exactly
    # representable in bf16 so the bf16 MXU operands agree with the f32
    # reference.
    def bf16_exact(x):
        return x.astype(jnp.bfloat16).astype(jnp.float32)

    bbox_feature = bf16_exact(jax.random.normal(k[0], (bs, P, H), jnp.float32))     # data_dict['bbox_feature']
    sem_cls_scores = bf16_exact(jax.random.normal(k[1], (bs, P, C), jnp.float32))   # data_dict['sem_cls_scores']
    lang_score = bf16_exact(jax.random.normal(k[2], (bs * L, C), jnp.float32))      # lang.eval_lang_cls(...)
    lang_emb = bf16_exact(jax.random.normal(k[3], (bs * L, H), jnp.float32))        # data_dict['lang_emb']
    objectness_pred = jax.random.bernoulli(k[4], 0.8, (bs, P)).astype(jnp.int32)
    object_cat_list = jax.random.randint(k[5], (bs, L), 0, C)

    out = divide_proposals(bbox_feature, sem_cls_scores, lang_score, lang_emb,
                           objectness_pred, object_cat_list, T)
    jax.block_until_ready(out)

    ref = _reference_weights(bbox_feature, sem_cls_scores, lang_score, lang_emb,
                             objectness_pred)
    np.testing.assert_allclose(np.asarray(out["coarse_weights"]),
                               np.asarray(ref), rtol=5e-3, atol=5e-3)

    assert out["coarse_weights"].shape == (bs * L, P)
    assert out["target_ids"].shape == (bs, L, T)
    assert out["target_feat"].shape == (bs, L, T, H)

    print("KERNEL_OK")
</pallas_src>

<mosaic_0001>
module attributes {stable_mosaic.version = 11 : i64} {
  func.func @kernel(%arg0: memref<2x24x64xbf16, #tpu.memory_space<vmem>>, %arg1: memref<2x64x128xbf16, #tpu.memory_space<vmem>>, %arg2: memref<2x1x128xf32, #tpu.memory_space<vmem>>, %arg3: memref<2x8x128xf32, #tpu.memory_space<vmem>>) attributes {dimension_semantics = [], scalar_prefetch = 0 : i64, scratch_operands = 0 : i64, tpu.core_type = #tpu.core_type<tc>} {
    %c0 = arith.constant 0 : index
    %c0_0 = arith.constant 0 : index
    %c0_1 = arith.constant 0 : index
    %0 = vector.load %arg0[%c0, %c0_0, %c0_1] : memref<2x24x64xbf16, #tpu.memory_space<vmem>>, vector<1x24x64xbf16>
    %1 = vector.shape_cast %0 : vector<1x24x64xbf16> to vector<24x64xbf16>
    %c0_2 = arith.constant 0 : index
    %c0_3 = arith.constant 0 : index
    %c0_4 = arith.constant 0 : index
    %2 = vector.load %arg1[%c0_2, %c0_3, %c0_4] : memref<2x64x128xbf16, #tpu.memory_space<vmem>>, vector<1x64x128xbf16>
    %3 = vector.shape_cast %2 : vector<1x64x128xbf16> to vector<64x128xbf16>
    %cst = arith.constant dense<0.000000e+00> : vector<24x128xf32>
    %4 = tpu.matmul %1, %3, %cst {dimension_numbers = #tpu.dot_dimension_numbers<[1], [0], [0], [1], [0, 0, 1, 1], [], []>} : vector<24x64xbf16>, vector<64x128xbf16>, vector<24x128xf32> -> vector<24x128xf32>
    %5 = vector.extract_strided_slice %4 {offsets = [0, 0], sizes = [8, 128], strides = [1, 1]} : vector<24x128xf32> to vector<8x128xf32>
    %6 = vector.extract_strided_slice %4 {offsets = [8, 0], sizes = [8, 128], strides = [1, 1]} : vector<24x128xf32> to vector<8x128xf32>
    %7 = vector.extract_strided_slice %4 {offsets = [16, 0], sizes = [8, 128], strides = [1, 1]} : vector<24x128xf32> to vector<8x128xf32>
    %8 = vector.extract_strided_slice %1 {offsets = [8, 0], sizes = [8, 64], strides = [1, 1]} : vector<24x64xbf16> to vector<8x64xbf16>
    %9 = arith.extf %8 : vector<8x64xbf16> to vector<8x64xf32>
    %10 = arith.mulf %9, %9 : vector<8x64xf32>
    %cst_5 = arith.constant dense<0.000000e+00> : vector<8xf32>
    %11 = vector.multi_reduction <add>, %10, %cst_5 [1] : vector<8x64xf32> to vector<8xf32>
    %12 = vector.shape_cast %11 : vector<8xf32> to vector<8x1xf32>
    %13 = math.sqrt %12 : vector<8x1xf32>
    %cst_6 = arith.constant 9.99999993E-9 : f32
    %14 = vector.broadcast %cst_6 : f32 to vector<8x1xf32>
    %15 = arith.maximumf %13, %14 : vector<8x1xf32>
    %cst_7 = arith.constant 1.000000e+00 : f32
    %16 = vector.broadcast %cst_7 : f32 to vector<8x1xf32>
    %17 = arith.divf %16, %15 : vector<8x1xf32>
    %18 = vector.extract_strided_slice %3 {offsets = [0, 0], sizes = [32, 128], strides = [1, 1]} : vector<64x128xbf16> to vector<32x128xbf16>
    %19 = arith.extf %18 : vector<32x128xbf16> to vector<32x128xf32>
    %20 = arith.mulf %19, %19 : vector<32x128xf32>
    %cst_8 = arith.constant dense<0.000000e+00> : vector<128xf32>
    %21 = vector.multi_reduction <add>, %20, %cst_8 [0] : vector<32x128xf32> to vector<128xf32>
    %22 = vector.shape_cast %21 : vector<128xf32> to vector<1x128xf32>
    %23 = math.sqrt %22 : vector<1x128xf32>
    %cst_9 = arith.constant 9.99999993E-9 : f32
    %24 = vector.broadcast %cst_9 : f32 to vector<1x128xf32>
    %25 = arith.maximumf %23, %24 : vector<1x128xf32>
    %cst_10 = arith.constant 1.000000e+00 : f32
    %26 = vector.broadcast %cst_10 : f32 to vector<1x128xf32>
    %27 = arith.divf %26, %25 : vector<1x128xf32>
    %28 = vector.broadcast %17 : vector<8x1xf32> to vector<8x128xf32>
    %29 = arith.mulf %6, %28 : vector<8x128xf32>
    %30 = vector.broadcast %27 : vector<1x128xf32> to vector<8x128xf32>
    %31 = arith.mulf %29, %30 : vector<8x128xf32>
    %cst_11 = arith.constant dense<0xFF800000> : vector<8xf32>
    %32 = vector.multi_reduction <maximumf>, %7, %cst_11 [1] : vector<8x128xf32> to vector<8xf32>
    %33 = vector.shape_cast %32 : vector<8xf32> to vector<8x1xf32>
    %34 = vector.broadcast %33 : vector<8x1xf32> to vector<8x128xf32>
    %35 = arith.subf %7, %34 : vector<8x128xf32>
    %36 = math.exp %35 : vector<8x128xf32>
    %cst_12 = arith.constant dense<0.000000e+00> : vector<8xf32>
    %37 = vector.multi_reduction <add>, %36, %cst_12 [1] : vector<8x128xf32> to vector<8xf32>
    %38 = vector.shape_cast %37 : vector<8xf32> to vector<8x1xf32>
    %39 = vector.broadcast %38 : vector<8x1xf32> to vector<8x128xf32>
    %40 = arith.divf %36, %39 : vector<8x128xf32>
    %cst_13 = arith.constant 5.000000e-01 : f32
    %41 = vector.broadcast %cst_13 : f32 to vector<8x128xf32>
    %42 = arith.mulf %41, %40 : vector<8x128xf32>
    %cst_14 = arith.constant dense<0xFF800000> : vector<8xf32>
    %43 = vector.multi_reduction <maximumf>, %5, %cst_14 [1] : vector<8x128xf32> to vector<8xf32>
    %44 = vector.shape_cast %43 : vector<8xf32> to vector<8x1xf32>
    %45 = vector.broadcast %44 : vector<8x1xf32> to vector<8x128xf32>
    %46 = arith.subf %5, %45 : vector<8x128xf32>
    %47 = math.exp %46 : vector<8x128xf32>
    %cst_15 = arith.constant dense<0.000000e+00> : vector<8xf32>
    %48 = vector.multi_reduction <add>, %47, %cst_15 [1] : vector<8x128xf32> to vector<8xf32>
    %49 = vector.shape_cast %48 : vector<8xf32> to vector<8x1xf32>
    %50 = vector.broadcast %49 : vector<8x1xf32> to vector<8x128xf32>
    %51 = arith.divf %47, %50 : vector<8x128xf32>
    %52 = arith.addf %42, %51 : vector<8x128xf32>
    %53 = arith.addf %52, %31 : vector<8x128xf32>
    %c0_16 = arith.constant 0 : index
    %c0_17 = arith.constant 0 : index
    %c0_18 = arith.constant 0 : index
    %54 = vector.load %arg2[%c0_16, %c0_17, %c0_18] : memref<2x1x128xf32, #tpu.memory_space<vmem>>, vector<1x1x128xf32>
    %55 = vector.shape_cast %54 : vector<1x1x128xf32> to vector<1x128xf32>
    %56 = vector.broadcast %55 : vector<1x128xf32> to vector<8x128xf32>
    %57 = arith.addf %53, %56 : vector<8x128xf32>
    %c0_19 = arith.constant 0 : index
    %c0_20 = arith.constant 0 : index
    %c0_21 = arith.constant 0 : index
    %58 = vector.load %arg3[%c0_19, %c0_20, %c0_21] : memref<2x8x128xf32, #tpu.memory_space<vmem>>, vector<1x8x128xf32>
    %59 = vector.shape_cast %58 : vector<1x8x128xf32> to vector<8x128xf32>
    %60 = vector.shape_cast %57 : vector<8x128xf32> to vector<1x8x128xf32>
    tpu.vector_store %arg3[%c0_19, %c0_20, %c0_21], %60 {strides = array<i32>} : memref<2x8x128xf32, #tpu.memory_space<vmem>>, vector<1x8x128xf32>,
    %c1 = arith.constant 1 : index
    %c0_22 = arith.constant 0 : index
    %c0_23 = arith.constant 0 : index
    %61 = vector.load %arg0[%c1, %c0_22, %c0_23] : memref<2x24x64xbf16, #tpu.memory_space<vmem>>, vector<1x24x64xbf16>
    %62 = vector.shape_cast %61 : vector<1x24x64xbf16> to vector<24x64xbf16>
    %c1_24 = arith.constant 1 : index
    %c0_25 = arith.constant 0 : index
    %c0_26 = arith.constant 0 : index
    %63 = vector.load %arg1[%c1_24, %c0_25, %c0_26] : memref<2x64x128xbf16, #tpu.memory_space<vmem>>, vector<1x64x128xbf16>
    %64 = vector.shape_cast %63 : vector<1x64x128xbf16> to vector<64x128xbf16>
    %cst_27 = arith.constant dense<0.000000e+00> : vector<24x128xf32>
    %65 = tpu.matmul %62, %64, %cst_27 {dimension_numbers = #tpu.dot_dimension_numbers<[1], [0], [0], [1], [0, 0, 1, 1], [], []>} : vector<24x64xbf16>, vector<64x128xbf16>, vector<24x128xf32> -> vector<24x128xf32>
    %66 = vector.extract_strided_slice %65 {offsets = [0, 0], sizes = [8, 128], strides = [1, 1]} : vector<24x128xf32> to vector<8x128xf32>
    %67 = vector.extract_strided_slice %65 {offsets = [8, 0], sizes = [8, 128], strides = [1, 1]} : vector<24x128xf32> to vector<8x128xf32>
    %68 = vector.extract_strided_slice %65 {offsets = [16, 0], sizes = [8, 128], strides = [1, 1]} : vector<24x128xf32> to vector<8x128xf32>
    %69 = vector.extract_strided_slice %62 {offsets = [8, 0], sizes = [8, 64], strides = [1, 1]} : vector<24x64xbf16> to vector<8x64xbf16>
    %70 = arith.extf %69 : vector<8x64xbf16> to vector<8x64xf32>
    %71 = arith.mulf %70, %70 : vector<8x64xf32>
    %cst_28 = arith.constant dense<0.000000e+00> : vector<8xf32>
    %72 = vector.multi_reduction <add>, %71, %cst_28 [1] : vector<8x64xf32> to vector<8xf32>
    %73 = vector.shape_cast %72 : vector<8xf32> to vector<8x1xf32>
    %74 = math.sqrt %73 : vector<8x1xf32>
    %cst_29 = arith.constant 9.99999993E-9 : f32
    %75 = vector.broadcast %cst_29 : f32 to vector<8x1xf32>
    %76 = arith.maximumf %74, %75 : vector<8x1xf32>
    %cst_30 = arith.constant 1.000000e+00 : f32
    %77 = vector.broadcast %cst_30 : f32 to vector<8x1xf32>
    %78 = arith.divf %77, %76 : vector<8x1xf32>
    %79 = vector.extract_strided_slice %64 {offsets = [0, 0], sizes = [32, 128], strides = [1, 1]} : vector<64x128xbf16> to vector<32x128xbf16>
    %80 = arith.extf %79 : vector<32x128xbf16> to vector<32x128xf32>
    %81 = arith.mulf %80, %80 : vector<32x128xf32>
    %cst_31 = arith.constant dense<0.000000e+00> : vector<128xf32>
    %82 = vector.multi_reduction <add>, %81, %cst_31 [0] : vector<32x128xf32> to vector<128xf32>
    %83 = vector.shape_cast %82 : vector<128xf32> to vector<1x128xf32>
    %84 = math.sqrt %83 : vector<1x128xf32>
    %cst_32 = arith.constant 9.99999993E-9 : f32
    %85 = vector.broadcast %cst_32 : f32 to vector<1x128xf32>
    %86 = arith.maximumf %84, %85 : vector<1x128xf32>
    %cst_33 = arith.constant 1.000000e+00 : f32
    %87 = vector.broadcast %cst_33 : f32 to vector<1x128xf32>
    %88 = arith.divf %87, %86 : vector<1x128xf32>
    %89 = vector.broadcast %78 : vector<8x1xf32> to vector<8x128xf32>
    %90 = arith.mulf %67, %89 : vector<8x128xf32>
    %91 = vector.broadcast %88 : vector<1x128xf32> to vector<8x128xf32>
    %92 = arith.mulf %90, %91 : vector<8x128xf32>
    %cst_34 = arith.constant dense<0xFF800000> : vector<8xf32>
    %93 = vector.multi_reduction <maximumf>, %68, %cst_34 [1] : vector<8x128xf32> to vector<8xf32>
    %94 = vector.shape_cast %93 : vector<8xf32> to vector<8x1xf32>
    %95 = vector.broadcast %94 : vector<8x1xf32> to vector<8x128xf32>
    %96 = arith.subf %68, %95 : vector<8x128xf32>
    %97 = math.exp %96 : vector<8x128xf32>
    %cst_35 = arith.constant dense<0.000000e+00> : vector<8xf32>
    %98 = vector.multi_reduction <add>, %97, %cst_35 [1] : vector<8x128xf32> to vector<8xf32>
    %99 = vector.shape_cast %98 : vector<8xf32> to vector<8x1xf32>
    %100 = vector.broadcast %99 : vector<8x1xf32> to vector<8x128xf32>
    %101 = arith.divf %97, %100 : vector<8x128xf32>
    %cst_36 = arith.constant 5.000000e-01 : f32
    %102 = vector.broadcast %cst_36 : f32 to vector<8x128xf32>
    %103 = arith.mulf %102, %101 : vector<8x128xf32>
    %cst_37 = arith.constant dense<0xFF800000> : vector<8xf32>
    %104 = vector.multi_reduction <maximumf>, %66, %cst_37 [1] : vector<8x128xf32> to vector<8xf32>
    %105 = vector.shape_cast %104 : vector<8xf32> to vector<8x1xf32>
    %106 = vector.broadcast %105 : vector<8x1xf32> to vector<8x128xf32>
    %107 = arith.subf %66, %106 : vector<8x128xf32>
    %108 = math.exp %107 : vector<8x128xf32>
    %cst_38 = arith.constant dense<0.000000e+00> : vector<8xf32>
    %109 = vector.multi_reduction <add>, %108, %cst_38 [1] : vector<8x128xf32> to vector<8xf32>
    %110 = vector.shape_cast %109 : vector<8xf32> to vector<8x1xf32>
    %111 = vector.broadcast %110 : vector<8x1xf32> to vector<8x128xf32>
    %112 = arith.divf %108, %111 : vector<8x128xf32>
    %113 = arith.addf %103, %112 : vector<8x128xf32>
    %114 = arith.addf %113, %92 : vector<8x128xf32>
    %c1_39 = arith.constant 1 : index
    %c0_40 = arith.constant 0 : index
    %c0_41 = arith.constant 0 : index
    %115 = vector.load %arg2[%c1_39, %c0_40, %c0_41] : memref<2x1x128xf32, #tpu.memory_space<vmem>>, vector<1x1x128xf32>
    %116 = vector.shape_cast %115 : vector<1x1x128xf32> to vector<1x128xf32>
    %117 = vector.broadcast %116 : vector<1x128xf32> to vector<8x128xf32>
    %118 = arith.addf %114, %117 : vector<8x128xf32>
    %c1_42 = arith.constant 1 : index
    %c0_43 = arith.constant 0 : index
    %c0_44 = arith.constant 0 : index
    %119 = vector.load %arg3[%c1_42, %c0_43, %c0_44] : memref<2x8x128xf32, #tpu.memory_space<vmem>>, vector<1x8x128xf32>
    %120 = vector.shape_cast %119 : vector<1x8x128xf32> to vector<8x128xf32>
    %121 = vector.shape_cast %118 : vector<8x128xf32> to vector<1x8x128xf32>
    tpu.vector_store %arg3[%c1_42, %c0_43, %c0_44], %121 {strides = array<i32>} : memref<2x8x128xf32, #tpu.memory_space<vmem>>, vector<1x8x128xf32>,
    return
  }
}

</mosaic_0001>

<llo_original>
// kernel: tpu_custom_call.1
$region0: #{tpu_custom_call.1}
  #allocation0 [shape = 'u32[]', space=smem, size = 0x4, offset = 0x4, fixed_abs, tag = 'smem constant byte address 0x4 - core index']
  #allocation1 [shape = 'u32[72,128]{1,0:T(1,128)}', space=vmem, size = 0x9000, scoped, tag = 'internal scratch']
  %s0 = inlined_call_operand.hbm [shape: bf16[2,24,64], index: 0, kind: input, shape index: {}]
  %s1 = inlined_call_operand.hbm [shape: bf16[2,64,128], index: 1, kind: input, shape index: {}]
  %s2 = inlined_call_operand.hbm [shape: f32[2,1,128], index: 2, kind: input, shape index: {}]
  %s3 = inlined_call_operand.hbm [shape: f32[2,8,128], index: 3, kind: output, shape index: {}]
  %s4 = sld [smem:[#allocation0]]
  $region34: #{tpu_custom_call.1} parent=0
    _
  %s6 = ssub.s32 1, %s4
  %s7 = scalar_select 0, %s6, %s4
  $region1: #{tpu_custom_call.1} parent=0
    #allocation2 [shape = 'u8[12288]{0}', space=vmem, size = 0x3000, scoped, tag = 'input window, operand 0, single buffered']
    #allocation3 [shape = 's32[1]{0}', space=sflag, size = 0x4, scoped, tag = 'scoped memory for tpu_custom_call.1']
    #allocation4 [shape = 's32[1]{0}', space=sflag, size = 0x4, scoped, tag = 'scoped memory for tpu_custom_call.1']
    #allocation5 [shape = 'u8[32768]{0}', space=vmem, size = 0x8000, scoped, tag = 'input window, operand 1, single buffered']
    #allocation6 [shape = 's32[1]{0}', space=sflag, size = 0x4, scoped, tag = 'scoped memory for tpu_custom_call.1']
    #allocation7 [shape = 'u8[1024]{0}', space=vmem, size = 0x400, scoped, tag = 'input window, operand 2, single buffered']
    #allocation8 [shape = 'u8[8192]{0}', space=vmem, size = 0x2000, scoped, tag = 'output window, operand 0, single buffered']
    %8 = vsyncpa [#allocation3], 0
    %9 = vsyncpa [#allocation6], 0
    %10 = vsyncpa [#allocation4], 0
    // Predicated region
    $region2: #{tpu_custom_call.1} parent=1 // pred_check
      _
    $region3: #{tpu_custom_call.1} parent=1 // pred_check_branch
      %12 = sbr.rel (0) target = $region5
    $region4: #{tpu_custom_call.1} parent=1 // pred_region
      %14 = vsyncadd [#allocation3], 0
      %s15 = sshll.u32 %s0, 4
      %s16 = int_to_ptr.hbm [resolvable:$true] %s15
      %s17 = sshll.u32 [#allocation2], 4
      %s18 = int_to_ptr.vmem [resolvable:$true] %s17
      %23 = dma.hbm_to_vmem [thread:$0]  %s16, 384, %s18, [#allocation3], 64, 64, 4
    $region5: #{tpu_custom_call.1} parent=1 // pred_fallthru
      _
    // Predicated region
    $region6: #{tpu_custom_call.1} parent=1 // pred_check
      _
    $region7: #{tpu_custom_call.1} parent=1 // pred_check_branch
      %25 = sbr.rel (0) target = $region9
    $region8: #{tpu_custom_call.1} parent=1 // pred_region
      %27 = vsyncadd [#allocation6], 0
      %s28 = sshll.u32 %s1, 4
      %s29 = int_to_ptr.hbm [resolvable:$true] %s28
      %s30 = sshll.u32 [#allocation5], 4
      %s31 = int_to_ptr.vmem [resolvable:$true] %s30
      %36 = dma.hbm_to_vmem [thread:$0]  %s29, 1024, %s31, [#allocation6], 64, 64, 4
    $region9: #{tpu_custom_call.1} parent=1 // pred_fallthru
      _
    // Predicated region
    $region10: #{tpu_custom_call.1} parent=1 // pred_check
      _
    $region11: #{tpu_custom_call.1} parent=1 // pred_check_branch
      %38 = sbr.rel (0) target = $region13
    $region12: #{tpu_custom_call.1} parent=1 // pred_region
      %40 = vsyncadd [#allocation6], 0
      %s41 = sshll.u32 %s2, 4
      %s42 = int_to_ptr.hbm [resolvable:$true] %s41
      %s43 = sshll.u32 [#allocation7], 4
      %s44 = int_to_ptr.vmem [resolvable:$true] %s43
      %49 = dma.hbm_to_vmem [thread:$0]  %s42, 32, %s44, [#allocation6], 16, 16, 1
    $region13: #{tpu_custom_call.1} parent=1 // pred_fallthru
      _
    // Predicated region
    $region14: #{tpu_custom_call.1} parent=1 // pred_check
      _
    $region15: #{tpu_custom_call.1} parent=1 // pred_check_branch
      %51 = sbr.rel (0) target = $region17
    $region16: #{tpu_custom_call.1} parent=1 // pred_region
      %53 = dma.done [#allocation3], 384
    $region17: #{tpu_custom_call.1} parent=1 // pred_fallthru
      _
    // Predicated region
    $region18: #{tpu_custom_call.1} parent=1 // pred_check
      _
    $region19: #{tpu_custom_call.1} parent=1 // pred_check_branch
      %55 = sbr.rel (0) target = $region21
    $region20: #{tpu_custom_call.1} parent=1 // pred_region
      %57 = dma.done [#allocation6], 1024
    $region21: #{tpu_custom_call.1} parent=1 // pred_fallthru
      _
    // Predicated region
    $region22: #{tpu_custom_call.1} parent=1 // pred_check
      _
    $region23: #{tpu_custom_call.1} parent=1 // pred_check_branch
      %59 = sbr.rel (0) target = $region25
    $region24: #{tpu_custom_call.1} parent=1 // pred_region
      %61 = dma.done [#allocation6], 32
    $region25: #{tpu_custom_call.1} parent=1 // pred_fallthru
      _
    %v63 = vld [vmem:[#allocation2] sm:$0xf]
    %v64 = vld [vmem:[#allocation2 + $0x4] sm:$0xf]
    %v65 = vld [vmem:[#allocation2 + $0x8] sm:$0xf]
    %v66 = vld [vmem:[#allocation5] sm:$0xf]
    %v67 = vld [vmem:[#allocation5 + $0x4] sm:$0xf]
    %v68 = vld [vmem:[#allocation5 + $0x8] sm:$0xf]
    %v69 = vld [vmem:[#allocation5 + $0xc] sm:$0xf]
    %v70 = vld [vmem:[#allocation5 + $0x10] sm:$0xf]
    %v71 = vld [vmem:[#allocation5 + $0x14] sm:$0xf]
    %v72 = vld [vmem:[#allocation5 + $0x18] sm:$0xf]
    %v73 = vld [vmem:[#allocation5 + $0x1c] sm:$0xf]
    %v77 = vunpack.c.l.b16 %v63
    %v78 = vunpack.c.l.b16 %v64
    %v79 = vunpack.c.l.b16 %v65
    %v80 = vpack.c.b16 %v78, %v77
    %v81 = vpack.c.b16 %v79, %v79
    %v90 = vunpack.c.l.b16 %v66
    %v91 = vunpack.c.l.b16 %v67
    %v92 = vunpack.c.l.b16 %v68
    %v93 = vunpack.c.l.b16 %v69
    %v94 = vunpack.c.l.b16 %v70
    %v95 = vunpack.c.l.b16 %v71
    %v96 = vunpack.c.l.b16 %v72
    %v97 = vunpack.c.l.b16 %v73
    %v98 = vpack.c.b16 %v91, %v90
    %v99 = vpack.c.b16 %v93, %v92
    %v100 = vpack.c.b16 %v95, %v94
    %v101 = vpack.c.b16 %v97, %v96
    %vm106 = vcmask 523264
    %v108 = vsel %vm106, %v80, 0
    %v111 = vsel %vm106, %v81, 0
    %113 = vmatpush.bf16.msra.mxu0 0
    %114 = vmatpush.bf16.msra.mxu0 0
    %115 = vmatpush.bf16.msra.mxu0 0
    %116 = vmatpush.bf16.msra.mxu0 0
    %117 = vmatpush.bf16.msra.mxu0 %v101
    %118 = vmatpush.bf16.msra.mxu0 %v100
    %119 = vmatpush.bf16.msra.mxu0 %v99
    %120 = vmatpush.bf16.msra.mxu0 %v98
    %121 = vmatmul.bf16.gmra.mxu0 %v108
    %v122 = vpop.f32.mrf.mxu0
    %v123 = vadd.f32 0.0, %v122
    %v124 = vpop.f32.mrf.mxu0
    %v125 = vadd.f32 0.0, %v124
    %126 = vmatmul.bf16.gmra.mxu0 %v111
    %v127 = vpop.f32.mrf.mxu0
    %v128 = vadd.f32 0.0, %v127
    %v129 = vpop.f32.mrf.mxu0
    %130 = vdwg.mxu0
    %v131 = vunpack.c.l.bf16 %v64
    %v132 = vmul.f32 %v131, %v131
    %v133 = vsel %vm106, %v132, 0.0
    %134 = vadd.xlane.f32.xlu0 %v133
    %v135 = vpop.xlane.xlu0 %134
    %v136 = vrsqrt.pop %v135
    %v137 = vmul.f32 %v136, %v135
    %v138 = vmul.f32 %v137, %v136
    %v139 = vmul.f32 0.5, %v138
    %v140 = vsub.f32 1.5, %v139
    %v141 = vmul.f32 %v136, %v140
    %v142 = vmul.f32 %v135, %v141
    %vm143 = vcmp.eq.f32.partialorder %v135, inf
    %v144 = vsel %vm143, %v135, %v142
    %vm145 = vcmp.eq.f32.partialorder %v135, 0.0
    %v146 = vand.u32 %v135, 2147483648
    %v147 = vsel %vm145, %v146, %v144
    %v148 = vmax.f32 %v147, 1e-08
    %v149 = vrcp.pop %v148
    %v150 = vmul.f32 %v148, %v149
    %v151 = vsub.f32 1.0, %v150
    %v152 = vmul.f32 %v149, %v151
    %v153 = vadd.f32 %v149, %v152
    %vm154 = vweird.f32 %v148
    %vm155 = vweird.f32 %v149
    %vm156 = vmor %vm154, %vm155
    %v157 = vsel %vm156, %v149, %v153
    %v158 = vand.u32 2147483647, %v148
    %vm159 = vcmp.eq.f32.partialorder %v158, 8.507059e+37
    %v160 = vand.u32 %v148, 2147483648
    %v161 = vor.u32 1.1754944e-38, %v160
    %v162 = vsel %vm159, %v161, %v157
    %v163 = vmul.f32 1.0, %v162
    %v164 = vunpack.c.l.bf16 %v66
    %v165 = vunpack.c.l.bf16 %v67
    %v166 = vunpack.c.l.bf16 %v68
    %v167 = vunpack.c.l.bf16 %v69
    %v168 = vmul.f32 %v164, %v164
    %v169 = vmul.f32 %v165, %v165
    %v170 = vmul.f32 %v166, %v166
    %v171 = vmul.f32 %v167, %v167
    %v172 = vadd.f32 %v168, %v169
    %v173 = vadd.f32 %v172, %v170
    %v174 = vadd.f32 %v173, %v171
    %v175 = vrot.slane %v174, 4
    %v176 = vadd.f32 %v174, %v175
    %v177 = vrot.slane %v176, 2
    %v178 = vadd.f32 %v176, %v177
    %v179 = vrot.slane %v178, 1
    %v180 = vadd.f32 %v178, %v179
    %v181 = vrsqrt.pop %v180
    %v182 = vmul.f32 %v181, %v180
    %v183 = vmul.f32 %v182, %v181
    %v184 = vmul.f32 0.5, %v183
    %v185 = vsub.f32 1.5, %v184
    %v186 = vmul.f32 %v181, %v185
    %v187 = vmul.f32 %v180, %v186
    %vm188 = vcmp.eq.f32.partialorder %v180, inf
    %v189 = vsel %vm188, %v180, %v187
    %vm190 = vcmp.eq.f32.partialorder %v180, 0.0
    %v191 = vand.u32 %v180, 2147483648
    %v192 = vsel %vm190, %v191, %v189
    %v193 = vmax.f32 %v192, 1e-08
    %v194 = vrcp.pop %v193
    %v195 = vmul.f32 %v193, %v194
    %v196 = vsub.f32 1.0, %v195
    %v197 = vmul.f32 %v194, %v196
    %v198 = vadd.f32 %v194, %v197
    %vm199 = vweird.f32 %v193
    %vm200 = vweird.f32 %v194
    %vm201 = vmor %vm199, %vm200
    %v202 = vsel %vm201, %v194, %v198
    %v203 = vand.u32 2147483647, %v193
    %vm204 = vcmp.eq.f32.partialorder %v203, 8.507059e+37
    %v205 = vand.u32 %v193, 2147483648
    %v206 = vor.u32 1.1754944e-38, %v205
    %v207 = vsel %vm204, %v206, %v202
    %v208 = vmul.f32 1.0, %v207
    %v209 = vmul.f32 %v125, %v163
    %v210 = vmul.f32 %v209, %v208
    %211 = vmax.xlane.f32.xlu0 %v128
    %v212 = vpop.xlane.xlu0 %211
    %v213 = vsub.f32 %v128, %v212
    %v214 = vmul.f32 %v213, 1.442695
    %v215 = vpow.pop %v214
    %216 = vadd.xlane.f32.xlu0 %v215
    %v217 = vpop.xlane.xlu0 %216
    %v218 = vrcp.pop %v217
    %v219 = vmul.f32 %v217, %v218
    %v220 = vsub.f32 1.0, %v219
    %v221 = vmul.f32 %v218, %v220
    %v222 = vadd.f32 %v218, %v221
    %vm223 = vweird.f32 %v217
    %vm224 = vweird.f32 %v218
    %vm225 = vmor %vm223, %vm224
    %v226 = vsel %vm225, %v218, %v222
    %v227 = vand.u32 2147483647, %v217
    %vm228 = vcmp.eq.f32.partialorder %v227, 8.507059e+37
    %v229 = vand.u32 %v217, 2147483648
    %v230 = vor.u32 1.1754944e-38, %v229
    %v231 = vsel %vm228, %v230, %v226
    %v232 = vmul.f32 %v215, %v231
    %v233 = vmul.f32 %v232, 0.5
    %234 = vmax.xlane.f32.xlu0 %v123
    %v235 = vpop.xlane.xlu0 %234
    %v236 = vsub.f32 %v123, %v235
    %v237 = vmul.f32 %v236, 1.442695
    %v238 = vpow.pop %v237
    %239 = vadd.xlane.f32.xlu0 %v238
    %v240 = vpop.xlane.xlu0 %239
    %v241 = vrcp.pop %v240
    %v242 = vmul.f32 %v240, %v241
    %v243 = vsub.f32 1.0, %v242
    %v244 = vmul.f32 %v241, %v243
    %v245 = vadd.f32 %v241, %v244
    %vm246 = vweird.f32 %v240
    %vm247 = vweird.f32 %v241
    %vm248 = vmor %vm246, %vm247
    %v249 = vsel %vm248, %v241, %v245
    %v250 = vand.u32 2147483647, %v240
    %vm251 = vcmp.eq.f32.partialorder %v250, 8.507059e+37
    %v252 = vand.u32 %v240, 2147483648
    %v253 = vor.u32 1.1754944e-38, %v252
    %v254 = vsel %vm251, %v253, %v249
    %v255 = vmul.f32 %v238, %v254
    %v256 = vadd.f32 %v233, %v255
    %v257 = vadd.f32 %v256, %v210
    %v258 = vld [vmem:[#allocation7] sm:$0x1]
    %v260 = vperm.slane %v258, 0
    %v262 = vadd.f32 %v257, %v260
    %263 = vst [vmem:[#allocation8] sm:$0xff] %v262
    %s264 = scalar_lea.vmem [#allocation2], 12
    %v265 = vld [vmem:[%s264] sm:$0xf]
    %v266 = vld [vmem:[%s264 + $0x4] sm:$0xf]
    %v267 = vld [vmem:[%s264 + $0x8] sm:$0xf]
    %s268 = scalar_lea.vmem [#allocation5], 32
    %v269 = vld [vmem:[%s268] sm:$0xf]
    %v270 = vld [vmem:[%s268 + $0x4] sm:$0xf]
    %v271 = vld [vmem:[%s268 + $0x8] sm:$0xf]
    %v272 = vld [vmem:[%s268 + $0xc] sm:$0xf]
    %v273 = vld [vmem:[%s268 + $0x10] sm:$0xf]
    %v274 = vld [vmem:[%s268 + $0x14] sm:$0xf]
    %v275 = vld [vmem:[%s268 + $0x18] sm:$0xf]
    %v276 = vld [vmem:[%s268 + $0x1c] sm:$0xf]
    %v280 = vunpack.c.l.b16 %v265
    %v281 = vunpack.c.l.b16 %v266
    %v282 = vunpack.c.l.b16 %v267
    %v283 = vpack.c.b16 %v281, %v280
    %v284 = vpack.c.b16 %v282, %v282
    %v293 = vunpack.c.l.b16 %v269
    %v294 = vunpack.c.l.b16 %v270
    %v295 = vunpack.c.l.b16 %v271
    %v296 = vunpack.c.l.b16 %v272
    %v297 = vunpack.c.l.b16 %v273
    %v298 = vunpack.c.l.b16 %v274
    %v299 = vunpack.c.l.b16 %v275
    %v300 = vunpack.c.l.b16 %v276
    %v301 = vpack.c.b16 %v294, %v293
    %v302 = vpack.c.b16 %v296, %v295
    %v303 = vpack.c.b16 %v298, %v297
    %v304 = vpack.c.b16 %v300, %v299
    %v310 = vsel %vm106, %v283, 0
    %v313 = vsel %vm106, %v284, 0
    %315 = vmatpush.bf16.msra.mxu0 0
    %316 = vmatpush.bf16.msra.mxu0 0
    %317 = vmatpush.bf16.msra.mxu0 0
    %318 = vmatpush.bf16.msra.mxu0 0
    %319 = vmatpush.bf16.msra.mxu0 %v304
    %320 = vmatpush.bf16.msra.mxu0 %v303
    %321 = vmatpush.bf16.msra.mxu0 %v302
    %322 = vmatpush.bf16.msra.mxu0 %v301
    %323 = vmatmul.bf16.gmra.mxu0 %v310
    %v324 = vpop.f32.mrf.mxu0
    %v325 = vadd.f32 0.0, %v324
    %v326 = vpop.f32.mrf.mxu0
    %v327 = vadd.f32 0.0, %v326
    %328 = vmatmul.bf16.gmra.mxu0 %v313
    %v329 = vpop.f32.mrf.mxu0
    %v330 = vadd.f32 0.0, %v329
    %v331 = vpop.f32.mrf.mxu0
    %332 = vdwg.mxu0
    %v333 = vunpack.c.l.bf16 %v266
    %v334 = vmul.f32 %v333, %v333
    %v335 = vsel %vm106, %v334, 0.0
    %336 = vadd.xlane.f32.xlu0 %v335
    %v337 = vpop.xlane.xlu0 %336
    %v338 = vrsqrt.pop %v337
    %v339 = vmul.f32 %v338, %v337
    %v340 = vmul.f32 %v339, %v338
    %v341 = vmul.f32 0.5, %v340
    %v342 = vsub.f32 1.5, %v341
    %v343 = vmul.f32 %v338, %v342
    %v344 = vmul.f32 %v337, %v343
    %vm345 = vcmp.eq.f32.partialorder %v337, inf
    %v346 = vsel %vm345, %v337, %v344
    %vm347 = vcmp.eq.f32.partialorder %v337, 0.0
    %v348 = vand.u32 %v337, 2147483648
    %v349 = vsel %vm347, %v348, %v346
    %v350 = vmax.f32 %v349, 1e-08
    %v351 = vrcp.pop %v350
    %v352 = vmul.f32 %v350, %v351
    %v353 = vsub.f32 1.0, %v352
    %v354 = vmul.f32 %v351, %v353
    %v355 = vadd.f32 %v351, %v354
    %vm356 = vweird.f32 %v350
    %vm357 = vweird.f32 %v351
    %vm358 = vmor %vm356, %vm357
    %v359 = vsel %vm358, %v351, %v355
    %v360 = vand.u32 2147483647, %v350
    %vm361 = vcmp.eq.f32.partialorder %v360, 8.507059e+37
    %v362 = vand.u32 %v350, 2147483648
    %v363 = vor.u32 1.1754944e-38, %v362
    %v364 = vsel %vm361, %v363, %v359
    %v365 = vmul.f32 1.0, %v364
    %v366 = vunpack.c.l.bf16 %v269
    %v367 = vunpack.c.l.bf16 %v270
    %v368 = vunpack.c.l.bf16 %v271
    %v369 = vunpack.c.l.bf16 %v272
    %v370 = vmul.f32 %v366, %v366
    %v371 = vmul.f32 %v367, %v367
    %v372 = vmul.f32 %v368, %v368
    %v373 = vmul.f32 %v369, %v369
    %v374 = vadd.f32 %v370, %v371
    %v375 = vadd.f32 %v374, %v372
    %v376 = vadd.f32 %v375, %v373
    %v377 = vrot.slane %v376, 4
    %v378 = vadd.f32 %v376, %v377
    %v379 = vrot.slane %v378, 2
    %v380 = vadd.f32 %v378, %v379
    %v381 = vrot.slane %v380, 1
    %v382 = vadd.f32 %v380, %v381
    %v383 = vrsqrt.pop %v382
    %v384 = vmul.f32 %v383, %v382
    %v385 = vmul.f32 %v384, %v383
    %v386 = vmul.f32 0.5, %v385
    %v387 = vsub.f32 1.5, %v386
    %v388 = vmul.f32 %v383, %v387
    %v389 = vmul.f32 %v382, %v388
    %vm390 = vcmp.eq.f32.partialorder %v382, inf
    %v391 = vsel %vm390, %v382, %v389
    %vm392 = vcmp.eq.f32.partialorder %v382, 0.0
    %v393 = vand.u32 %v382, 2147483648
    %v394 = vsel %vm392, %v393, %v391
    %v395 = vmax.f32 %v394, 1e-08
    %v396 = vrcp.pop %v395
    %v397 = vmul.f32 %v395, %v396
    %v398 = vsub.f32 1.0, %v397
    %v399 = vmul.f32 %v396, %v398
    %v400 = vadd.f32 %v396, %v399
    %vm401 = vweird.f32 %v395
    %vm402 = vweird.f32 %v396
    %vm403 = vmor %vm401, %vm402
    %v404 = vsel %vm403, %v396, %v400
    %v405 = vand.u32 2147483647, %v395
    %vm406 = vcmp.eq.f32.partialorder %v405, 8.507059e+37
    %v407 = vand.u32 %v395, 2147483648
    %v408 = vor.u32 1.1754944e-38, %v407
    %v409 = vsel %vm406, %v408, %v404
    %v410 = vmul.f32 1.0, %v409
    %v411 = vmul.f32 %v327, %v365
    %v412 = vmul.f32 %v411, %v410
    %413 = vmax.xlane.f32.xlu0 %v330
    %v414 = vpop.xlane.xlu0 %413
    %v415 = vsub.f32 %v330, %v414
    %v416 = vmul.f32 %v415, 1.442695
    %v417 = vpow.pop %v416
    %418 = vadd.xlane.f32.xlu0 %v417
    %v419 = vpop.xlane.xlu0 %418
    %v420 = vrcp.pop %v419
    %v421 = vmul.f32 %v419, %v420
    %v422 = vsub.f32 1.0, %v421
    %v423 = vmul.f32 %v420, %v422
    %v424 = vadd.f32 %v420, %v423
    %vm425 = vweird.f32 %v419
    %vm426 = vweird.f32 %v420
    %vm427 = vmor %vm425, %vm426
    %v428 = vsel %vm427, %v420, %v424
    %v429 = vand.u32 2147483647, %v419
    %vm430 = vcmp.eq.f32.partialorder %v429, 8.507059e+37
    %v431 = vand.u32 %v419, 2147483648
    %v432 = vor.u32 1.1754944e-38, %v431
    %v433 = vsel %vm430, %v432, %v428
    %v434 = vmul.f32 %v417, %v433
    %v435 = vmul.f32 %v434, 0.5
    %436 = vmax.xlane.f32.xlu0 %v325
    %v437 = vpop.xlane.xlu0 %436
    %v438 = vsub.f32 %v325, %v437
    %v439 = vmul.f32 %v438, 1.442695
    %v440 = vpow.pop %v439
    %441 = vadd.xlane.f32.xlu0 %v440
    %v442 = vpop.xlane.xlu0 %441
    %v443 = vrcp.pop %v442
    %v444 = vmul.f32 %v442, %v443
    %v445 = vsub.f32 1.0, %v444
    %v446 = vmul.f32 %v443, %v445
    %v447 = vadd.f32 %v443, %v446
    %vm448 = vweird.f32 %v442
    %vm449 = vweird.f32 %v443
    %vm450 = vmor %vm448, %vm449
    %v451 = vsel %vm450, %v443, %v447
    %v452 = vand.u32 2147483647, %v442
    %vm453 = vcmp.eq.f32.partialorder %v452, 8.507059e+37
    %v454 = vand.u32 %v442, 2147483648
    %v455 = vor.u32 1.1754944e-38, %v454
    %v456 = vsel %vm453, %v455, %v451
    %v457 = vmul.f32 %v440, %v456
    %v458 = vadd.f32 %v435, %v457
    %v459 = vadd.f32 %v458, %v412
    %s460 = scalar_lea.vmem [#allocation7], 1
    %v461 = vld [vmem:[%s460] sm:$0x1]
    %v463 = vperm.slane %v461, 0
    %v465 = vadd.f32 %v459, %v463
    %s466 = scalar_lea.vmem [#allocation8], 8
    %467 = vst [vmem:[%s466] sm:$0xff] %v465
    // Predicated region
    $region26: #{tpu_custom_call.1} parent=1 // pred_check
      _
    $region27: #{tpu_custom_call.1} parent=1 // pred_check_branch
      %469 = sbr.rel (0) target = $region29
    $region28: #{tpu_custom_call.1} parent=1 // pred_region
      %471 = vsyncadd [#allocation4], 0
      %s472 = sshll.u32 [#allocation8], 4
      %s473 = int_to_ptr.vmem [resolvable:$true] %s472
      %s474 = sshll.u32 %s3, 4
      %s475 = int_to_ptr.hbm [resolvable:$true] %s474
      %480 = dma.vmem_to_hbm [thread:$0]  %s473, 256, %s475, [#allocation4], 128, 128, 8
    $region29: #{tpu_custom_call.1} parent=1 // pred_fallthru
      _
    // Predicated region
    $region30: #{tpu_custom_call.1} parent=1 // pred_check
      _
    $region31: #{tpu_custom_call.1} parent=1 // pred_check_branch
      %482 = sbr.rel (0) target = $region33
    $region32: #{tpu_custom_call.1} parent=1 // pred_region
      %484 = dma.done [#allocation4], 256
    $region33: #{tpu_custom_call.1} parent=1 // pred_fallthru
      _
    %485 = vsyncpa [#allocation3], 1
    %486 = vsyncpa [#allocation6], 1
    %487 = vsyncpa [#allocation4], 1

</llo_original>
